<compile_context>
chip_gen: v6e
topology: v6e:2x2x1
jax: 0.10.0
libtpu: 0.0.40
codegen_flags: <defaults>
</compile_context>

<pallas_src>
import jax
import jax.numpy as jnp
from jax.experimental import pallas as pl
from jax.experimental.pallas import tpu as pltpu


# ---------------------------------------------------------------------------
# Model dimensions (small, consistent with the module's shapes)
# ---------------------------------------------------------------------------
B = 2            # batch (number of particle images)
P = 64           # points per particle image
D_IN = 4         # per-point features: x, y, z, value
H1 = 32          # first shared-MLP width
H2 = 64          # second shared-MLP width (pooled feature size)
LATENT = 32      # encoder.latent_size
NUM_CLASSES = 5  # model_cfg 'num_classes' default
C_PAD = 128      # lane-dense padded logits width (sliced back to NUM_CLASSES)

MAX_PARTICLES_PER_TILE = 8   # 8 * P = 512 shared-MLP rows per grid step


# ---------------------------------------------------------------------------
# Pallas kernel: PointNet encoder + final linear layer for one batch tile
# ---------------------------------------------------------------------------
def particle_classifier_kernel(pts_ref,                     # (bt*P, D_IN)
                               w1_ref, b1_ref,              # (D_IN, H1), (1, H1)
                               w2_ref, b2_ref,              # (H1, H2), (1, H2)
                               w3_ref, b3_ref,              # (H2, LATENT), (1, LATENT)
                               w4_ref, b4_ref,              # (LATENT, C_PAD), (1, C_PAD)
                               out_ref):                    # (bt, C_PAD)
    bt = out_ref.shape[0]                 # particles in this tile
    n = pts_ref.shape[0]                  # points in this tile (= bt * P)
    p = n // bt

    pts = pts_ref[...]                    # (n, D_IN)
    w1 = w1_ref[...]                      # (D_IN, H1)

    # Shared MLP layer 1: K = D_IN = 4 is far too small for a worthwhile MXU
    # pass -> unrolled VPU broadcast multiply-adds instead of jnp.dot.
    h = pts[:, 0:1] * w1[0:1, :]
    for d in range(1, w1.shape[0]):
        h = h + pts[:, d:d + 1] * w1[d:d + 1, :]
    h = jnp.maximum(h + b1_ref[...], 0.0)                       # (n, H1)

    # Shared MLP layer 2: one batched MXU matmul over all n rows of the tile.
    h = jnp.dot(h, w2_ref[...], preferred_element_type=jnp.float32) + b2_ref[...]
    h = jnp.maximum(h, 0.0)                                     # (n, H2)

    # Symmetric max-pool over the P points of each particle.
    pooled = jnp.max(h.reshape(bt, p, h.shape[-1]), axis=1)     # (bt, H2)

    # Encoder latent FC + ReLU.
    latent = jnp.dot(pooled, w3_ref[...], preferred_element_type=jnp.float32) + b3_ref[...]
    latent = jnp.maximum(latent, 0.0)                           # (bt, LATENT)

    # final_layer: Linear(latent_size, num_classes), lane-padded to C_PAD.
    logits = jnp.dot(latent, w4_ref[...], preferred_element_type=jnp.float32) + b4_ref[...]
    out_ref[...] = logits.astype(out_ref.dtype)                 # (bt, C_PAD) unmasked store


def particle_image_classifier(point_cloud, params):
    """point_cloud: (B, P, D_IN) float32 -> dict {'logits': [(B, NUM_CLASSES)]}"""
    w1, b1, w2, b2, w3, b3, w4, b4 = params
    Bn, Pn, Din = point_cloud.shape

    # Lane-dense final layer: zero-pad (LATENT, 5) -> (LATENT, 128) so the
    # kernel's only output store is a full 128-lane unmasked vst.
    w4p = jnp.zeros((w4.shape[0], C_PAD), w4.dtype).at[:, :NUM_CLASSES].set(w4)
    b4p = jnp.zeros((1, C_PAD), b4.dtype).at[:, :NUM_CLASSES].set(b4)

    # Batch tiling: the whole (small) batch goes through in ONE grid step;
    # large batches are tiled at 8 particles (512 MLP rows) per step with
    # weights resident across steps (constant index_maps).
    bt = Bn if Bn <= MAX_PARTICLES_PER_TILE else MAX_PARTICLES_PER_TILE
    pad_b = (-Bn) % bt
    if pad_b:
        point_cloud = jnp.pad(point_cloud, ((0, pad_b), (0, 0), (0, 0)))
    Bp = Bn + pad_b
    pts_flat = point_cloud.reshape(Bp * Pn, Din)        # (B*P, D_IN) rows on sublanes

    full = lambda arr: pl.BlockSpec(arr.shape, lambda i: (0,) * arr.ndim)

    logits_pad = pl.pallas_call(
        particle_classifier_kernel,
        out_shape=jax.ShapeDtypeStruct((Bp, C_PAD), jnp.float32),
        grid_spec=pltpu.PrefetchScalarGridSpec(
            num_scalar_prefetch=0,
            grid=(Bp // bt,),
            in_specs=[
                pl.BlockSpec((bt * Pn, Din), lambda i: (i, 0)),   # point tile
                full(w1), full(b1),
                full(w2), full(b2),
                full(w3), full(b3),
                full(w4p), full(b4p),
            ],
            out_specs=pl.BlockSpec((bt, C_PAD), lambda i: (i, 0)),
        ),
        compiler_params=pltpu.CompilerParams(
            dimension_semantics=("parallel",)),
    )(pts_flat, w1, b1, w2, b2, w3, b3, w4p, b4p)

    return {'logits': [logits_pad[:Bn, :NUM_CLASSES]]}


# ---------------------------------------------------------------------------
# Pure-JAX reference for correctness checking
# ---------------------------------------------------------------------------
def reference_forward(point_cloud, params):
    w1, b1, w2, b2, w3, b3, w4, b4 = params
    h = jnp.maximum(point_cloud @ w1 + b1, 0.0)
    h = jnp.maximum(h @ w2 + b2, 0.0)
    pooled = jnp.max(h, axis=1)
    latent = jnp.maximum(pooled @ w3 + b3[0], 0.0)
    return latent @ w4 + b4[0]


# ---------------------------------------------------------------------------
# Deterministic parameter init + run
# ---------------------------------------------------------------------------
def init_params(key):
    ks = jax.random.split(key, 8)
    def lin(kw, kb, fan_in, fan_out):
        bound = 1.0 / jnp.sqrt(fan_in)
        w = jax.random.uniform(kw, (fan_in, fan_out), jnp.float32, -bound, bound)
        b = jax.random.uniform(kb, (1, fan_out), jnp.float32, -bound, bound)
        return w, b
    w1, b1 = lin(ks[0], ks[1], D_IN, H1)
    w2, b2 = lin(ks[2], ks[3], H1, H2)
    w3, b3 = lin(ks[4], ks[5], H2, LATENT)
    w4, b4 = lin(ks[6], ks[7], LATENT, NUM_CLASSES)
    return (w1, b1, w2, b2, w3, b3, w4, b4)


if __name__ == "__main__":
    key = jax.random.PRNGKey(0)
    k_pts, k_par = jax.random.split(key)

    # synthetic dense point cloud: (B, P, [x, y, z, value])
    point_cloud = jax.random.normal(k_pts, (B, P, D_IN), dtype=jnp.float32)
    params = init_params(k_par)

    res = particle_image_classifier(point_cloud, params)
    logits = jax.block_until_ready(res['logits'][0])

    ref = reference_forward(point_cloud, params)
    assert logits.shape == (B, NUM_CLASSES)
    assert jnp.allclose(logits, ref, atol=1e-4, rtol=1e-4)

    print("KERNEL_OK")
</pallas_src>

<mosaic_0001>
module attributes {stable_mosaic.version = 11 : i64} {
  func.func @particle_classifier_kernel(%arg0: i32, %arg1: memref<128x4xf32, #tpu.memory_space<vmem>>, %arg2: memref<4x32xf32, #tpu.memory_space<vmem>>, %arg3: memref<1x32xf32, #tpu.memory_space<vmem>>, %arg4: memref<32x64xf32, #tpu.memory_space<vmem>>, %arg5: memref<1x64xf32, #tpu.memory_space<vmem>>, %arg6: memref<64x32xf32, #tpu.memory_space<vmem>>, %arg7: memref<1x32xf32, #tpu.memory_space<vmem>>, %arg8: memref<32x128xf32, #tpu.memory_space<vmem>>, %arg9: memref<1x128xf32, #tpu.memory_space<vmem>>, %arg10: memref<2x128xf32, #tpu.memory_space<vmem>>) attributes {dimension_semantics = [#tpu.dimension_semantics<parallel>], iteration_bounds = array<i64: 1>, scalar_prefetch = 0 : i64, scratch_operands = 0 : i64, tpu.core_type = #tpu.core_type<tc>, window_params = [{transform_indices = @transform_0, window_bounds = array<i64: 128, 4>}, {pipeline_mode = #tpu.pipeline_mode<synchronous>, transform_indices = @transform_1, window_bounds = array<i64: 4, 32>}, {pipeline_mode = #tpu.pipeline_mode<synchronous>, transform_indices = @transform_2, window_bounds = array<i64: 1, 32>}, {pipeline_mode = #tpu.pipeline_mode<synchronous>, transform_indices = @transform_3, window_bounds = array<i64: 32, 64>}, {pipeline_mode = #tpu.pipeline_mode<synchronous>, transform_indices = @transform_4, window_bounds = array<i64: 1, 64>}, {pipeline_mode = #tpu.pipeline_mode<synchronous>, transform_indices = @transform_5, window_bounds = array<i64: 64, 32>}, {pipeline_mode = #tpu.pipeline_mode<synchronous>, transform_indices = @transform_6, window_bounds = array<i64: 1, 32>}, {pipeline_mode = #tpu.pipeline_mode<synchronous>, transform_indices = @transform_7, window_bounds = array<i64: 32, 128>}, {pipeline_mode = #tpu.pipeline_mode<synchronous>, transform_indices = @transform_8, window_bounds = array<i64: 1, 128>}, {transform_indices = @transform_9, window_bounds = array<i64: 2, 128>}]} {
    %c0 = arith.constant 0 : index
    %c0_0 = arith.constant 0 : index
    %0 = vector.load %arg1[%c0, %c0_0] : memref<128x4xf32, #tpu.memory_space<vmem>>, vector<128x4xf32>
    %c0_1 = arith.constant 0 : index
    %c0_2 = arith.constant 0 : index
    %1 = vector.load %arg2[%c0_1, %c0_2] : memref<4x32xf32, #tpu.memory_space<vmem>>, vector<4x32xf32>
    %2 = vector.extract_strided_slice %0 {offsets = [0, 0], sizes = [128, 1], strides = [1, 1]} : vector<128x4xf32> to vector<128x1xf32>
    %3 = vector.extract_strided_slice %1 {offsets = [0, 0], sizes = [1, 32], strides = [1, 1]} : vector<4x32xf32> to vector<1x32xf32>
    %4 = vector.broadcast %2 : vector<128x1xf32> to vector<128x32xf32>
    %5 = vector.broadcast %3 : vector<1x32xf32> to vector<128x32xf32>
    %6 = arith.mulf %4, %5 : vector<128x32xf32>
    %7 = vector.extract_strided_slice %0 {offsets = [0, 1], sizes = [128, 1], strides = [1, 1]} : vector<128x4xf32> to vector<128x1xf32>
    %8 = vector.extract_strided_slice %1 {offsets = [1, 0], sizes = [1, 32], strides = [1, 1]} : vector<4x32xf32> to vector<1x32xf32>
    %9 = vector.broadcast %7 : vector<128x1xf32> to vector<128x32xf32>
    %10 = vector.broadcast %8 : vector<1x32xf32> to vector<128x32xf32>
    %11 = arith.mulf %9, %10 : vector<128x32xf32>
    %12 = arith.addf %6, %11 : vector<128x32xf32>
    %13 = vector.extract_strided_slice %0 {offsets = [0, 2], sizes = [128, 1], strides = [1, 1]} : vector<128x4xf32> to vector<128x1xf32>
    %14 = vector.extract_strided_slice %1 {offsets = [2, 0], sizes = [1, 32], strides = [1, 1]} : vector<4x32xf32> to vector<1x32xf32>
    %15 = vector.broadcast %13 : vector<128x1xf32> to vector<128x32xf32>
    %16 = vector.broadcast %14 : vector<1x32xf32> to vector<128x32xf32>
    %17 = arith.mulf %15, %16 : vector<128x32xf32>
    %18 = arith.addf %12, %17 : vector<128x32xf32>
    %19 = vector.extract_strided_slice %0 {offsets = [0, 3], sizes = [128, 1], strides = [1, 1]} : vector<128x4xf32> to vector<128x1xf32>
    %20 = vector.extract_strided_slice %1 {offsets = [3, 0], sizes = [1, 32], strides = [1, 1]} : vector<4x32xf32> to vector<1x32xf32>
    %21 = vector.broadcast %19 : vector<128x1xf32> to vector<128x32xf32>
    %22 = vector.broadcast %20 : vector<1x32xf32> to vector<128x32xf32>
    %23 = arith.mulf %21, %22 : vector<128x32xf32>
    %24 = arith.addf %18, %23 : vector<128x32xf32>
    %c0_3 = arith.constant 0 : index
    %c0_4 = arith.constant 0 : index
    %25 = vector.load %arg3[%c0_3, %c0_4] : memref<1x32xf32, #tpu.memory_space<vmem>>, vector<1x32xf32>
    %26 = vector.broadcast %25 : vector<1x32xf32> to vector<128x32xf32>
    %27 = arith.addf %24, %26 : vector<128x32xf32>
    %cst = arith.constant 0.000000e+00 : f32
    %28 = vector.broadcast %cst : f32 to vector<128x32xf32>
    %29 = arith.maximumf %27, %28 : vector<128x32xf32>
    %c0_5 = arith.constant 0 : index
    %c0_6 = arith.constant 0 : index
    %30 = vector.load %arg4[%c0_5, %c0_6] : memref<32x64xf32, #tpu.memory_space<vmem>>, vector<32x64xf32>
    %cst_7 = arith.constant dense<0.000000e+00> : vector<128x64xf32>
    %31 = tpu.matmul %29, %30, %cst_7 {dimension_numbers = #tpu.dot_dimension_numbers<[1], [0], [0], [1], [0, 0, 1, 1], [], []>} : vector<128x32xf32>, vector<32x64xf32>, vector<128x64xf32> -> vector<128x64xf32>
    %c0_8 = arith.constant 0 : index
    %c0_9 = arith.constant 0 : index
    %32 = vector.load %arg5[%c0_8, %c0_9] : memref<1x64xf32, #tpu.memory_space<vmem>>, vector<1x64xf32>
    %33 = vector.broadcast %32 : vector<1x64xf32> to vector<128x64xf32>
    %34 = arith.addf %31, %33 : vector<128x64xf32>
    %cst_10 = arith.constant 0.000000e+00 : f32
    %35 = vector.broadcast %cst_10 : f32 to vector<128x64xf32>
    %36 = arith.maximumf %34, %35 : vector<128x64xf32>
    %37 = vector.shape_cast %36 : vector<128x64xf32> to vector<2x64x64xf32>
    %cst_11 = arith.constant dense<0xFF800000> : vector<2x64xf32>
    %38 = vector.multi_reduction <maximumf>, %37, %cst_11 [1] : vector<2x64x64xf32> to vector<2x64xf32>
    %c0_12 = arith.constant 0 : index
    %c0_13 = arith.constant 0 : index
    %39 = vector.load %arg6[%c0_12, %c0_13] : memref<64x32xf32, #tpu.memory_space<vmem>>, vector<64x32xf32>
    %cst_14 = arith.constant dense<0.000000e+00> : vector<2x32xf32>
    %40 = tpu.matmul %38, %39, %cst_14 {dimension_numbers = #tpu.dot_dimension_numbers<[1], [0], [0], [1], [0, 0, 1, 1], [], []>} : vector<2x64xf32>, vector<64x32xf32>, vector<2x32xf32> -> vector<2x32xf32>
    %c0_15 = arith.constant 0 : index
    %c0_16 = arith.constant 0 : index
    %41 = vector.load %arg7[%c0_15, %c0_16] : memref<1x32xf32, #tpu.memory_space<vmem>>, vector<1x32xf32>
    %42 = vector.broadcast %41 : vector<1x32xf32> to vector<2x32xf32>
    %43 = arith.addf %40, %42 : vector<2x32xf32>
    %cst_17 = arith.constant 0.000000e+00 : f32
    %44 = vector.broadcast %cst_17 : f32 to vector<2x32xf32>
    %45 = arith.maximumf %43, %44 : vector<2x32xf32>
    %c0_18 = arith.constant 0 : index
    %c0_19 = arith.constant 0 : index
    %46 = vector.load %arg8[%c0_18, %c0_19] : memref<32x128xf32, #tpu.memory_space<vmem>>, vector<32x128xf32>
    %cst_20 = arith.constant dense<0.000000e+00> : vector<2x128xf32>
    %47 = tpu.matmul %45, %46, %cst_20 {dimension_numbers = #tpu.dot_dimension_numbers<[1], [0], [0], [1], [0, 0, 1, 1], [], []>} : vector<2x32xf32>, vector<32x128xf32>, vector<2x128xf32> -> vector<2x128xf32>
    %c0_21 = arith.constant 0 : index
    %c0_22 = arith.constant 0 : index
    %48 = vector.load %arg9[%c0_21, %c0_22] : memref<1x128xf32, #tpu.memory_space<vmem>>, vector<1x128xf32>
    %49 = vector.broadcast %48 : vector<1x128xf32> to vector<2x128xf32>
    %50 = arith.addf %47, %49 : vector<2x128xf32>
    %c0_23 = arith.constant 0 : index
    %c0_24 = arith.constant 0 : index
    %51 = vector.load %arg10[%c0_23, %c0_24] : memref<2x128xf32, #tpu.memory_space<vmem>>, vector<2x128xf32>
    tpu.vector_store %arg10[%c0_23, %c0_24], %50 {strides = array<i32>} : memref<2x128xf32, #tpu.memory_space<vmem>>, vector<2x128xf32>,
    return
  }
  func.func @transform_0(%arg0: i32) -> (i32, i32) {
    %c0_i32 = arith.constant 0 : i32
    %c0_i32_0 = arith.constant 0 : i32
    return %arg0, %c0_i32 : i32, i32
  }
  func.func @transform_1(%arg0: i32) -> (i32, i32) {
    %c0_i32 = arith.constant 0 : i32
    %c0_i32_0 = arith.constant 0 : i32
    %c0_i32_1 = arith.constant 0 : i32
    return %c0_i32, %c0_i32_0 : i32, i32
  }
  func.func @transform_2(%arg0: i32) -> (i32, i32) {
    %c0_i32 = arith.constant 0 : i32
    %c0_i32_0 = arith.constant 0 : i32
    %c0_i32_1 = arith.constant 0 : i32
    return %c0_i32, %c0_i32_0 : i32, i32
  }
  func.func @transform_3(%arg0: i32) -> (i32, i32) {
    %c0_i32 = arith.constant 0 : i32
    %c0_i32_0 = arith.constant 0 : i32
    %c0_i32_1 = arith.constant 0 : i32
    return %c0_i32, %c0_i32_0 : i32, i32
  }
  func.func @transform_4(%arg0: i32) -> (i32, i32) {
    %c0_i32 = arith.constant 0 : i32
    %c0_i32_0 = arith.constant 0 : i32
    %c0_i32_1 = arith.constant 0 : i32
    return %c0_i32, %c0_i32_0 : i32, i32
  }
  func.func @transform_5(%arg0: i32) -> (i32, i32) {
    %c0_i32 = arith.constant 0 : i32
    %c0_i32_0 = arith.constant 0 : i32
    %c0_i32_1 = arith.constant 0 : i32
    return %c0_i32, %c0_i32_0 : i32, i32
  }
  func.func @transform_6(%arg0: i32) -> (i32, i32) {
    %c0_i32 = arith.constant 0 : i32
    %c0_i32_0 = arith.constant 0 : i32
    %c0_i32_1 = arith.constant 0 : i32
    return %c0_i32, %c0_i32_0 : i32, i32
  }
  func.func @transform_7(%arg0: i32) -> (i32, i32) {
    %c0_i32 = arith.constant 0 : i32
    %c0_i32_0 = arith.constant 0 : i32
    %c0_i32_1 = arith.constant 0 : i32
    return %c0_i32, %c0_i32_0 : i32, i32
  }
  func.func @transform_8(%arg0: i32) -> (i32, i32) {
    %c0_i32 = arith.constant 0 : i32
    %c0_i32_0 = arith.constant 0 : i32
    %c0_i32_1 = arith.constant 0 : i32
    return %c0_i32, %c0_i32_0 : i32, i32
  }
  func.func @transform_9(%arg0: i32) -> (i32, i32) {
    %c0_i32 = arith.constant 0 : i32
    %c0_i32_0 = arith.constant 0 : i32
    return %arg0, %c0_i32 : i32, i32
  }
}

</mosaic_0001>

<llo_original>
// kernel: tpu_custom_call.1
$region0: #{tpu_custom_call.1}
  #allocation0 [shape = 'u32[]', space=smem, size = 0x4, offset = 0x4, fixed_abs, tag = 'smem constant byte address 0x4 - core index']
  #allocation1 [shape = 'u32[144,128]{1,0:T(1,128)}', space=vmem, size = 0x12000, scoped, tag = 'internal scratch']
  %s0 = inlined_call_operand.vmem [shape: f32[128,4], index: 0, kind: input, shape index: {}]
  %s1 = inlined_call_operand.vmem [shape: f32[4,32], index: 1, kind: input, shape index: {}]
  %s2 = inlined_call_operand.vmem [shape: f32[1,32], index: 2, kind: input, shape index: {}]
  %s3 = inlined_call_operand.vmem [shape: f32[32,64], index: 3, kind: input, shape index: {}]
  %s4 = inlined_call_operand.vmem [shape: f32[1,64], index: 4, kind: input, shape index: {}]
  %s5 = inlined_call_operand.vmem [shape: f32[64,32], index: 5, kind: input, shape index: {}]
  %s6 = inlined_call_operand.vmem [shape: f32[1,32], index: 6, kind: input, shape index: {}]
  %s7 = inlined_call_operand.vmem [shape: f32[32,128], index: 7, kind: input, shape index: {}]
  %s8 = inlined_call_operand.vmem [shape: f32[1,128], index: 8, kind: input, shape index: {}]
  %s9 = inlined_call_operand.hbm [shape: f32[2,128], index: 9, kind: output, shape index: {}]
  %s10 = sld [smem:[#allocation0]]
  $region46: #{tpu_custom_call.1} parent=0
    _
  %s12 = ssub.s32 1, %s10
  %s13 = scalar_select 0, %s12, %s10
  $region1: #{tpu_custom_call.1} parent=0
    #allocation2 [shape = 'u8[1024]{0}', space=vmem, size = 0x400, scoped, tag = 'output window, operand 0, single buffered']
    #allocation3 [shape = 's32[1]{0}', space=sflag, size = 0x4, scoped, tag = 'scoped memory for tpu_custom_call.1']
    %14 = vsyncpa [#allocation3], 0
    // Predicated region
    $region2: #{tpu_custom_call.1} parent=1 // pred_check
      _
    $region3: #{tpu_custom_call.1} parent=1 // pred_check_branch
      %16 = sbr.rel (0) target = $region5
    $region4: #{tpu_custom_call.1} parent=1 // pred_region
      _
    $region5: #{tpu_custom_call.1} parent=1 // pred_fallthru
      _
    // Predicated region
    $region6: #{tpu_custom_call.1} parent=1 // pred_check
      _
    $region7: #{tpu_custom_call.1} parent=1 // pred_check_branch
      %18 = sbr.rel (0) target = $region9
    $region8: #{tpu_custom_call.1} parent=1 // pred_region
      _
    $region9: #{tpu_custom_call.1} parent=1 // pred_fallthru
      _
    // Predicated region
    $region10: #{tpu_custom_call.1} parent=1 // pred_check
      _
    $region11: #{tpu_custom_call.1} parent=1 // pred_check_branch
      %20 = sbr.rel (0) target = $region13
    $region12: #{tpu_custom_call.1} parent=1 // pred_region
      _
    $region13: #{tpu_custom_call.1} parent=1 // pred_fallthru
      _
    // Predicated region
    $region14: #{tpu_custom_call.1} parent=1 // pred_check
      _
    $region15: #{tpu_custom_call.1} parent=1 // pred_check_branch
      %22 = sbr.rel (0) target = $region17
    $region16: #{tpu_custom_call.1} parent=1 // pred_region
      _
    $region17: #{tpu_custom_call.1} parent=1 // pred_fallthru
      _
    // Predicated region
    $region18: #{tpu_custom_call.1} parent=1 // pred_check
      _
    $region19: #{tpu_custom_call.1} parent=1 // pred_check_branch
      %24 = sbr.rel (0) target = $region21
    $region20: #{tpu_custom_call.1} parent=1 // pred_region
      _
    $region21: #{tpu_custom_call.1} parent=1 // pred_fallthru
      _
    // Predicated region
    $region22: #{tpu_custom_call.1} parent=1 // pred_check
      _
    $region23: #{tpu_custom_call.1} parent=1 // pred_check_branch
      %26 = sbr.rel (0) target = $region25
    $region24: #{tpu_custom_call.1} parent=1 // pred_region
      _
    $region25: #{tpu_custom_call.1} parent=1 // pred_fallthru
      _
    // Predicated region
    $region26: #{tpu_custom_call.1} parent=1 // pred_check
      _
    $region27: #{tpu_custom_call.1} parent=1 // pred_check_branch
      %28 = sbr.rel (0) target = $region29
    $region28: #{tpu_custom_call.1} parent=1 // pred_region
      _
    $region29: #{tpu_custom_call.1} parent=1 // pred_fallthru
      _
    // Predicated region
    $region30: #{tpu_custom_call.1} parent=1 // pred_check
      _
    $region31: #{tpu_custom_call.1} parent=1 // pred_check_branch
      %30 = sbr.rel (0) target = $region33
    $region32: #{tpu_custom_call.1} parent=1 // pred_region
      _
    $region33: #{tpu_custom_call.1} parent=1 // pred_fallthru
      _
    // Predicated region
    $region34: #{tpu_custom_call.1} parent=1 // pred_check
      _
    $region35: #{tpu_custom_call.1} parent=1 // pred_check_branch
      %32 = sbr.rel (0) target = $region37
    $region36: #{tpu_custom_call.1} parent=1 // pred_region
      _
    $region37: #{tpu_custom_call.1} parent=1 // pred_fallthru
      _
    %v33 = vld [vmem:[%s0] sm:$0xff]
    %v34 = vld [vmem:[%s0 + $0x8] sm:$0xff]
    %v35 = vld [vmem:[%s0 + $0x10] sm:$0xff]
    %v36 = vld [vmem:[%s0 + $0x18] sm:$0xff]
    %v37 = vld [vmem:[%s0 + $0x20] sm:$0xff]
    %v38 = vld [vmem:[%s0 + $0x28] sm:$0xff]
    %v39 = vld [vmem:[%s0 + $0x30] sm:$0xff]
    %v40 = vld [vmem:[%s0 + $0x38] sm:$0xff]
    %v41 = vld [vmem:[%s0 + $0x40] sm:$0xff]
    %v42 = vld [vmem:[%s0 + $0x48] sm:$0xff]
    %v43 = vld [vmem:[%s0 + $0x50] sm:$0xff]
    %v44 = vld [vmem:[%s0 + $0x58] sm:$0xff]
    %v45 = vld [vmem:[%s0 + $0x60] sm:$0xff]
    %v46 = vld [vmem:[%s0 + $0x68] sm:$0xff]
    %v47 = vld [vmem:[%s0 + $0x70] sm:$0xff]
    %v48 = vld [vmem:[%s0 + $0x78] sm:$0xff]
    %v49 = vld [vmem:[%s1] sm:$0xf]
    %51 = vset.pattern.permute.xlu0 0
    %52 = vperm.xlu0 %51, %v33
    %v53 = vpop.permute.xlu0 %52
    %56 = vset.pattern.permute.xlu0 0
    %57 = vperm.xlu0 %56, %v34
    %v58 = vpop.permute.xlu0 %57
    %61 = vset.pattern.permute.xlu0 0
    %62 = vperm.xlu0 %61, %v35
    %v63 = vpop.permute.xlu0 %62
    %66 = vset.pattern.permute.xlu0 0
    %67 = vperm.xlu0 %66, %v36
    %v68 = vpop.permute.xlu0 %67
    %71 = vset.pattern.permute.xlu0 0
    %72 = vperm.xlu0 %71, %v37
    %v73 = vpop.permute.xlu0 %72
    %76 = vset.pattern.permute.xlu0 0
    %77 = vperm.xlu0 %76, %v38
    %v78 = vpop.permute.xlu0 %77
    %81 = vset.pattern.permute.xlu0 0
    %82 = vperm.xlu0 %81, %v39
    %v83 = vpop.permute.xlu0 %82
    %86 = vset.pattern.permute.xlu0 0
    %87 = vperm.xlu0 %86, %v40
    %v88 = vpop.permute.xlu0 %87
    %91 = vset.pattern.permute.xlu0 0
    %92 = vperm.xlu0 %91, %v41
    %v93 = vpop.permute.xlu0 %92
    %96 = vset.pattern.permute.xlu0 0
    %97 = vperm.xlu0 %96, %v42
    %v98 = vpop.permute.xlu0 %97
    %101 = vset.pattern.permute.xlu0 0
    %102 = vperm.xlu0 %101, %v43
    %v103 = vpop.permute.xlu0 %102
    %106 = vset.pattern.permute.xlu0 0
    %107 = vperm.xlu0 %106, %v44
    %v108 = vpop.permute.xlu0 %107
    %111 = vset.pattern.permute.xlu0 0
    %112 = vperm.xlu0 %111, %v45
    %v113 = vpop.permute.xlu0 %112
    %116 = vset.pattern.permute.xlu0 0
    %117 = vperm.xlu0 %116, %v46
    %v118 = vpop.permute.xlu0 %117
    %121 = vset.pattern.permute.xlu0 0
    %122 = vperm.xlu0 %121, %v47
    %v123 = vpop.permute.xlu0 %122
    %126 = vset.pattern.permute.xlu0 0
    %127 = vperm.xlu0 %126, %v48
    %v128 = vpop.permute.xlu0 %127
    %v130 = vlaneseq
    %v131 = vshrl.u32 %v130, 7
    %v132 = vsub.s32 0, %v131
    %v133 = vrot.slane %v49, %v132
    %v134 = vmul.f32 %v53, %v133
    %v135 = vmul.f32 %v58, %v133
    %v136 = vmul.f32 %v63, %v133
    %v137 = vmul.f32 %v68, %v133
    %v138 = vmul.f32 %v73, %v133
    %v139 = vmul.f32 %v78, %v133
    %v140 = vmul.f32 %v83, %v133
    %v141 = vmul.f32 %v88, %v133
    %v142 = vmul.f32 %v93, %v133
    %v143 = vmul.f32 %v98, %v133
    %v144 = vmul.f32 %v103, %v133
    %v145 = vmul.f32 %v108, %v133
    %v146 = vmul.f32 %v113, %v133
    %v147 = vmul.f32 %v118, %v133
    %v148 = vmul.f32 %v123, %v133
    %v149 = vmul.f32 %v128, %v133
    %150 = vset.pattern.permute.xlu0 1
    %151 = vperm.xlu0 %150, %v33
    %v152 = vpop.permute.xlu0 %151
    %154 = vset.pattern.permute.xlu0 1
    %155 = vperm.xlu0 %154, %v34
    %v156 = vpop.permute.xlu0 %155
    %158 = vset.pattern.permute.xlu0 1
    %159 = vperm.xlu0 %158, %v35
    %v160 = vpop.permute.xlu0 %159
    %162 = vset.pattern.permute.xlu0 1
    %163 = vperm.xlu0 %162, %v36
    %v164 = vpop.permute.xlu0 %163
    %166 = vset.pattern.permute.xlu0 1
    %167 = vperm.xlu0 %166, %v37
    %v168 = vpop.permute.xlu0 %167
    %170 = vset.pattern.permute.xlu0 1
    %171 = vperm.xlu0 %170, %v38
    %v172 = vpop.permute.xlu0 %171
    %174 = vset.pattern.permute.xlu0 1
    %175 = vperm.xlu0 %174, %v39
    %v176 = vpop.permute.xlu0 %175
    %178 = vset.pattern.permute.xlu0 1
    %179 = vperm.xlu0 %178, %v40
    %v180 = vpop.permute.xlu0 %179
    %182 = vset.pattern.permute.xlu0 1
    %183 = vperm.xlu0 %182, %v41
    %v184 = vpop.permute.xlu0 %183
    %186 = vset.pattern.permute.xlu0 1
    %187 = vperm.xlu0 %186, %v42
    %v188 = vpop.permute.xlu0 %187
    %190 = vset.pattern.permute.xlu0 1
    %191 = vperm.xlu0 %190, %v43
    %v192 = vpop.permute.xlu0 %191
    %194 = vset.pattern.permute.xlu0 1
    %195 = vperm.xlu0 %194, %v44
    %v196 = vpop.permute.xlu0 %195
    %198 = vset.pattern.permute.xlu0 1
    %199 = vperm.xlu0 %198, %v45
    %v200 = vpop.permute.xlu0 %199
    %202 = vset.pattern.permute.xlu0 1
    %203 = vperm.xlu0 %202, %v46
    %v204 = vpop.permute.xlu0 %203
    %206 = vset.pattern.permute.xlu0 1
    %207 = vperm.xlu0 %206, %v47
    %v208 = vpop.permute.xlu0 %207
    %210 = vset.pattern.permute.xlu0 1
    %211 = vperm.xlu0 %210, %v48
    %v212 = vpop.permute.xlu0 %211
    %v214 = vlaneseq
    %v215 = vshrl.u32 %v214, 7
    %v216 = vsub.s32 1, %v215
    %v217 = vrot.slane %v49, %v216
    %v218 = vmul.f32 %v152, %v217
    %v219 = vmul.f32 %v156, %v217
    %v220 = vmul.f32 %v160, %v217
    %v221 = vmul.f32 %v164, %v217
    %v222 = vmul.f32 %v168, %v217
    %v223 = vmul.f32 %v172, %v217
    %v224 = vmul.f32 %v176, %v217
    %v225 = vmul.f32 %v180, %v217
    %v226 = vmul.f32 %v184, %v217
    %v227 = vmul.f32 %v188, %v217
    %v228 = vmul.f32 %v192, %v217
    %v229 = vmul.f32 %v196, %v217
    %v230 = vmul.f32 %v200, %v217
    %v231 = vmul.f32 %v204, %v217
    %v232 = vmul.f32 %v208, %v217
    %v233 = vmul.f32 %v212, %v217
    %v234 = vadd.f32 %v134, %v218
    %v235 = vadd.f32 %v135, %v219
    %v236 = vadd.f32 %v136, %v220
    %v237 = vadd.f32 %v137, %v221
    %v238 = vadd.f32 %v138, %v222
    %v239 = vadd.f32 %v139, %v223
    %v240 = vadd.f32 %v140, %v224
    %v241 = vadd.f32 %v141, %v225
    %v242 = vadd.f32 %v142, %v226
    %v243 = vadd.f32 %v143, %v227
    %v244 = vadd.f32 %v144, %v228
    %v245 = vadd.f32 %v145, %v229
    %v246 = vadd.f32 %v146, %v230
    %v247 = vadd.f32 %v147, %v231
    %v248 = vadd.f32 %v148, %v232
    %v249 = vadd.f32 %v149, %v233
    %250 = vset.pattern.permute.xlu0 2
    %251 = vperm.xlu0 %250, %v33
    %v252 = vpop.permute.xlu0 %251
    %254 = vset.pattern.permute.xlu0 2
    %255 = vperm.xlu0 %254, %v34
    %v256 = vpop.permute.xlu0 %255
    %258 = vset.pattern.permute.xlu0 2
    %259 = vperm.xlu0 %258, %v35
    %v260 = vpop.permute.xlu0 %259
    %262 = vset.pattern.permute.xlu0 2
    %263 = vperm.xlu0 %262, %v36
    %v264 = vpop.permute.xlu0 %263
    %266 = vset.pattern.permute.xlu0 2
    %267 = vperm.xlu0 %266, %v37
    %v268 = vpop.permute.xlu0 %267
    %270 = vset.pattern.permute.xlu0 2
    %271 = vperm.xlu0 %270, %v38
    %v272 = vpop.permute.xlu0 %271
    %274 = vset.pattern.permute.xlu0 2
    %275 = vperm.xlu0 %274, %v39
    %v276 = vpop.permute.xlu0 %275
    %278 = vset.pattern.permute.xlu0 2
    %279 = vperm.xlu0 %278, %v40
    %v280 = vpop.permute.xlu0 %279
    %282 = vset.pattern.permute.xlu0 2
    %283 = vperm.xlu0 %282, %v41
    %v284 = vpop.permute.xlu0 %283
    %286 = vset.pattern.permute.xlu0 2
    %287 = vperm.xlu0 %286, %v42
    %v288 = vpop.permute.xlu0 %287
    %290 = vset.pattern.permute.xlu0 2
    %291 = vperm.xlu0 %290, %v43
    %v292 = vpop.permute.xlu0 %291
    %294 = vset.pattern.permute.xlu0 2
    %295 = vperm.xlu0 %294, %v44
    %v296 = vpop.permute.xlu0 %295
    %298 = vset.pattern.permute.xlu0 2
    %299 = vperm.xlu0 %298, %v45
    %v300 = vpop.permute.xlu0 %299
    %302 = vset.pattern.permute.xlu0 2
    %303 = vperm.xlu0 %302, %v46
    %v304 = vpop.permute.xlu0 %303
    %306 = vset.pattern.permute.xlu0 2
    %307 = vperm.xlu0 %306, %v47
    %v308 = vpop.permute.xlu0 %307
    %310 = vset.pattern.permute.xlu0 2
    %311 = vperm.xlu0 %310, %v48
    %v312 = vpop.permute.xlu0 %311
    %v314 = vlaneseq
    %v315 = vshrl.u32 %v314, 7
    %v316 = vsub.s32 2, %v315
    %v317 = vrot.slane %v49, %v316
    %v318 = vmul.f32 %v252, %v317
    %v319 = vmul.f32 %v256, %v317
    %v320 = vmul.f32 %v260, %v317
    %v321 = vmul.f32 %v264, %v317
    %v322 = vmul.f32 %v268, %v317
    %v323 = vmul.f32 %v272, %v317
    %v324 = vmul.f32 %v276, %v317
    %v325 = vmul.f32 %v280, %v317
    %v326 = vmul.f32 %v284, %v317
    %v327 = vmul.f32 %v288, %v317
    %v328 = vmul.f32 %v292, %v317
    %v329 = vmul.f32 %v296, %v317
    %v330 = vmul.f32 %v300, %v317
    %v331 = vmul.f32 %v304, %v317
    %v332 = vmul.f32 %v308, %v317
    %v333 = vmul.f32 %v312, %v317
    %v334 = vadd.f32 %v234, %v318
    %v335 = vadd.f32 %v235, %v319
    %v336 = vadd.f32 %v236, %v320
    %v337 = vadd.f32 %v237, %v321
    %v338 = vadd.f32 %v238, %v322
    %v339 = vadd.f32 %v239, %v323
    %v340 = vadd.f32 %v240, %v324
    %v341 = vadd.f32 %v241, %v325
    %v342 = vadd.f32 %v242, %v326
    %v343 = vadd.f32 %v243, %v327
    %v344 = vadd.f32 %v244, %v328
    %v345 = vadd.f32 %v245, %v329
    %v346 = vadd.f32 %v246, %v330
    %v347 = vadd.f32 %v247, %v331
    %v348 = vadd.f32 %v248, %v332
    %v349 = vadd.f32 %v249, %v333
    %350 = vset.pattern.permute.xlu0 3
    %351 = vperm.xlu0 %350, %v33
    %v352 = vpop.permute.xlu0 %351
    %354 = vset.pattern.permute.xlu0 3
    %355 = vperm.xlu0 %354, %v34
    %v356 = vpop.permute.xlu0 %355
    %358 = vset.pattern.permute.xlu0 3
    %359 = vperm.xlu0 %358, %v35
    %v360 = vpop.permute.xlu0 %359
    %362 = vset.pattern.permute.xlu0 3
    %363 = vperm.xlu0 %362, %v36
    %v364 = vpop.permute.xlu0 %363
    %366 = vset.pattern.permute.xlu0 3
    %367 = vperm.xlu0 %366, %v37
    %v368 = vpop.permute.xlu0 %367
    %370 = vset.pattern.permute.xlu0 3
    %371 = vperm.xlu0 %370, %v38
    %v372 = vpop.permute.xlu0 %371
    %374 = vset.pattern.permute.xlu0 3
    %375 = vperm.xlu0 %374, %v39
    %v376 = vpop.permute.xlu0 %375
    %378 = vset.pattern.permute.xlu0 3
    %379 = vperm.xlu0 %378, %v40
    %v380 = vpop.permute.xlu0 %379
    %382 = vset.pattern.permute.xlu0 3
    %383 = vperm.xlu0 %382, %v41
    %v384 = vpop.permute.xlu0 %383
    %386 = vset.pattern.permute.xlu0 3
    %387 = vperm.xlu0 %386, %v42
    %v388 = vpop.permute.xlu0 %387
    %390 = vset.pattern.permute.xlu0 3
    %391 = vperm.xlu0 %390, %v43
    %v392 = vpop.permute.xlu0 %391
    %394 = vset.pattern.permute.xlu0 3
    %395 = vperm.xlu0 %394, %v44
    %v396 = vpop.permute.xlu0 %395
    %398 = vset.pattern.permute.xlu0 3
    %399 = vperm.xlu0 %398, %v45
    %v400 = vpop.permute.xlu0 %399
    %402 = vset.pattern.permute.xlu0 3
    %403 = vperm.xlu0 %402, %v46
    %v404 = vpop.permute.xlu0 %403
    %406 = vset.pattern.permute.xlu0 3
    %407 = vperm.xlu0 %406, %v47
    %v408 = vpop.permute.xlu0 %407
    %410 = vset.pattern.permute.xlu0 3
    %411 = vperm.xlu0 %410, %v48
    %v412 = vpop.permute.xlu0 %411
    %v414 = vlaneseq
    %v415 = vshrl.u32 %v414, 7
    %v416 = vsub.s32 3, %v415
    %v417 = vrot.slane %v49, %v416
    %v418 = vmul.f32 %v352, %v417
    %v419 = vmul.f32 %v356, %v417
    %v420 = vmul.f32 %v360, %v417
    %v421 = vmul.f32 %v364, %v417
    %v422 = vmul.f32 %v368, %v417
    %v423 = vmul.f32 %v372, %v417
    %v424 = vmul.f32 %v376, %v417
    %v425 = vmul.f32 %v380, %v417
    %v426 = vmul.f32 %v384, %v417
    %v427 = vmul.f32 %v388, %v417
    %v428 = vmul.f32 %v392, %v417
    %v429 = vmul.f32 %v396, %v417
    %v430 = vmul.f32 %v400, %v417
    %v431 = vmul.f32 %v404, %v417
    %v432 = vmul.f32 %v408, %v417
    %v433 = vmul.f32 %v412, %v417
    %v434 = vadd.f32 %v334, %v418
    %v435 = vadd.f32 %v335, %v419
    %v436 = vadd.f32 %v336, %v420
    %v437 = vadd.f32 %v337, %v421
    %v438 = vadd.f32 %v338, %v422
    %v439 = vadd.f32 %v339, %v423
    %v440 = vadd.f32 %v340, %v424
    %v441 = vadd.f32 %v341, %v425
    %v442 = vadd.f32 %v342, %v426
    %v443 = vadd.f32 %v343, %v427
    %v444 = vadd.f32 %v344, %v428
    %v445 = vadd.f32 %v345, %v429
    %v446 = vadd.f32 %v346, %v430
    %v447 = vadd.f32 %v347, %v431
    %v448 = vadd.f32 %v348, %v432
    %v449 = vadd.f32 %v349, %v433
    %v450 = vld [vmem:[%s2] sm:$0x1]
    %v452 = vlaneseq
    %v453 = vshrl.u32 %v452, 7
    %v454 = vsub.s32 0, %v453
    %v455 = vrot.slane %v450, %v454
    %v457 = vadd.f32 %v434, %v455
    %v458 = vadd.f32 %v435, %v455
    %v459 = vadd.f32 %v436, %v455
    %v460 = vadd.f32 %v437, %v455
    %v461 = vadd.f32 %v438, %v455
    %v462 = vadd.f32 %v439, %v455
    %v463 = vadd.f32 %v440, %v455
    %v464 = vadd.f32 %v441, %v455
    %v465 = vadd.f32 %v442, %v455
    %v466 = vadd.f32 %v443, %v455
    %v467 = vadd.f32 %v444, %v455
    %v468 = vadd.f32 %v445, %v455
    %v469 = vadd.f32 %v446, %v455
    %v470 = vadd.f32 %v447, %v455
    %v471 = vadd.f32 %v448, %v455
    %v472 = vadd.f32 %v449, %v455
    %v473 = vmax.f32 %v457, 0.0
    %v474 = vmax.f32 %v458, 0.0
    %v475 = vmax.f32 %v459, 0.0
    %v476 = vmax.f32 %v460, 0.0
    %v477 = vmax.f32 %v461, 0.0
    %v478 = vmax.f32 %v462, 0.0
    %v479 = vmax.f32 %v463, 0.0
    %v480 = vmax.f32 %v464, 0.0
    %v481 = vmax.f32 %v465, 0.0
    %v482 = vmax.f32 %v466, 0.0
    %v483 = vmax.f32 %v467, 0.0
    %v484 = vmax.f32 %v468, 0.0
    %v485 = vmax.f32 %v469, 0.0
    %v486 = vmax.f32 %v470, 0.0
    %v487 = vmax.f32 %v471, 0.0
    %v488 = vmax.f32 %v472, 0.0
    %v489 = vld [vmem:[%s3] sm:$0xff]
    %v490 = vld [vmem:[%s3 + $0x8] sm:$0xff]
    %v491 = vld [vmem:[%s3 + $0x10] sm:$0xff]
    %v492 = vld [vmem:[%s3 + $0x18] sm:$0xff]
    %v493 = vld [vmem:[%s4] sm:$0x1]
    %v495 = vlaneseq
    %v496 = vshrl.u32 %v495, 7
    %v497 = vsub.s32 0, %v496
    %v498 = vrot.slane %v493, %v497
    %vm500 = vcmask 261120
    %v502 = vsel %vm500, %v473, 0
    %v505 = vsel %vm500, %v474, 0
    %v508 = vsel %vm500, %v475, 0
    %v511 = vsel %vm500, %v476, 0
    %v514 = vsel %vm500, %v477, 0
    %v517 = vsel %vm500, %v478, 0
    %v520 = vsel %vm500, %v479, 0
    %v523 = vsel %vm500, %v480, 0
    %v526 = vsel %vm500, %v481, 0
    %v529 = vsel %vm500, %v482, 0
    %v532 = vsel %vm500, %v483, 0
    %v535 = vsel %vm500, %v484, 0
    %v538 = vsel %vm500, %v485, 0
    %v541 = vsel %vm500, %v486, 0
    %v544 = vsel %vm500, %v487, 0
    %v547 = vsel %vm500, %v488, 0
    %549 = vmatprep.subr.mxu0 0.0
    %550 = vmatpush1.msra.mxu0 0.0
    %551 = vmatprep.subr.mxu0 0.0
    %552 = vmatpush1.msra.mxu0 0.0
    %553 = vmatprep.subr.mxu0 0.0
    %554 = vmatpush1.msra.mxu0 0.0
    %555 = vmatprep.subr.mxu0 0.0
    %556 = vmatpush1.msra.mxu0 0.0
    %557 = vmatprep.subr.mxu0 0.0
    %558 = vmatpush1.msra.mxu0 0.0
    %559 = vmatprep.subr.mxu0 0.0
    %560 = vmatpush1.msra.mxu0 0.0
    %561 = vmatprep.subr.mxu0 0.0
    %562 = vmatpush1.msra.mxu0 0.0
    %563 = vmatprep.subr.mxu0 0.0
    %564 = vmatpush1.msra.mxu0 0.0
    %565 = vmatprep.subr.mxu0 0.0
    %566 = vmatpush1.msra.mxu0 0.0
    %567 = vmatprep.subr.mxu0 0.0
    %568 = vmatpush1.msra.mxu0 0.0
    %569 = vmatprep.subr.mxu0 0.0
    %570 = vmatpush1.msra.mxu0 0.0
    %571 = vmatprep.subr.mxu0 0.0
    %572 = vmatpush1.msra.mxu0 0.0
    %573 = vmatprep.subr.mxu0 0.0
    %574 = vmatpush1.msra.mxu0 %v492
    %575 = vmatprep.subr.mxu0 0.0
    %576 = vmatpush1.msra.mxu0 %v491
    %577 = vmatprep.subr.mxu0 0.0
    %578 = vmatpush1.msra.mxu0 %v490
    %579 = vmatprep.subr.mxu0 0.0
    %580 = vmatpush1.msra.mxu0 %v489
    %581 = vmatprep.subr.mxu0 0.0
    %582 = vmatpush2.msra.mxu0 0.0
    %583 = vmatprep.subr.mxu0 0.0
    %584 = vmatpush2.msra.mxu0 0.0
    %585 = vmatprep.subr.mxu0 0.0
    %586 = vmatpush2.msra.mxu0 0.0
    %587 = vmatprep.subr.mxu0 0.0
    %588 = vmatpush2.msra.mxu0 0.0
    %589 = vmatprep.subr.mxu0 0.0
    %590 = vmatpush2.msra.mxu0 0.0
    %591 = vmatprep.subr.mxu0 0.0
    %592 = vmatpush2.msra.mxu0 0.0
    %593 = vmatprep.subr.mxu0 0.0
    %594 = vmatpush2.msra.mxu0 0.0
    %595 = vmatprep.subr.mxu0 0.0
    %596 = vmatpush2.msra.mxu0 0.0
    %597 = vmatprep.subr.mxu0 0.0
    %598 = vmatpush2.msra.mxu0 0.0
    %599 = vmatprep.subr.mxu0 0.0
    %600 = vmatpush2.msra.mxu0 0.0
    %601 = vmatprep.subr.mxu0 0.0
    %602 = vmatpush2.msra.mxu0 0.0
    %603 = vmatprep.subr.mxu0 0.0
    %604 = vmatpush2.msra.mxu0 0.0
    %605 = vmatprep.subr.mxu0 0.0
    %606 = vmatpush2.msra.mxu0 0.0
    %607 = vmatprep.subr.mxu0 0.0
    %608 = vmatpush2.msra.mxu0 0.0
    %609 = vmatprep.subr.mxu0 0.0
    %610 = vmatpush2.msra.mxu0 0.0
    %611 = vmatprep.subr.mxu0 0.0
    %612 = vmatpush2.msra.mxu0 0.0
    %613 = vmatprep.mubr.f32.mxu0 0.0
    %614 = vmatmul.mubr.f32.gmra.mxu0 %v502
    %v615 = vpop.f32.mrf.mxu0
    %v616 = vadd.f32 %v498, %v615
    %v617 = vpop.f32.mrf.mxu0
    %618 = vmatprep.mubr.f32.mxu0 0.0
    %619 = vmatmul.mubr.f32.gmra.mxu0 %v505
    %v620 = vpop.f32.mrf.mxu0
    %v621 = vadd.f32 %v498, %v620
    %v622 = vpop.f32.mrf.mxu0
    %623 = vmatprep.mubr.f32.mxu0 0.0
    %624 = vmatmul.mubr.f32.gmra.mxu0 %v508
    %v625 = vpop.f32.mrf.mxu0
    %v626 = vadd.f32 %v498, %v625
    %v627 = vpop.f32.mrf.mxu0
    %628 = vmatprep.mubr.f32.mxu0 0.0
    %629 = vmatmul.mubr.f32.gmra.mxu0 %v511
    %v630 = vpop.f32.mrf.mxu0
    %v631 = vadd.f32 %v498, %v630
    %v632 = vpop.f32.mrf.mxu0
    %633 = vmatprep.mubr.f32.mxu0 0.0
    %634 = vmatmul.mubr.f32.gmra.mxu0 %v514
    %v635 = vpop.f32.mrf.mxu0
    %v636 = vadd.f32 %v498, %v635
    %v637 = vpop.f32.mrf.mxu0
    %638 = vmatprep.mubr.f32.mxu0 0.0
    %639 = vmatmul.mubr.f32.gmra.mxu0 %v517
    %v640 = vpop.f32.mrf.mxu0
    %v641 = vadd.f32 %v498, %v640
    %v642 = vpop.f32.mrf.mxu0
    %643 = vmatprep.mubr.f32.mxu0 0.0
    %644 = vmatmul.mubr.f32.gmra.mxu0 %v520
    %v645 = vpop.f32.mrf.mxu0
    %v646 = vadd.f32 %v498, %v645
    %v647 = vpop.f32.mrf.mxu0
    %648 = vmatprep.mubr.f32.mxu0 0.0
    %649 = vmatmul.mubr.f32.gmra.mxu0 %v523
    %v650 = vpop.f32.mrf.mxu0
    %v651 = vadd.f32 %v498, %v650
    %v652 = vpop.f32.mrf.mxu0
    %653 = vmatprep.mubr.f32.mxu0 0.0
    %654 = vmatmul.mubr.f32.gmra.mxu0 %v526
    %v655 = vpop.f32.mrf.mxu0
    %v656 = vadd.f32 %v498, %v655
    %v657 = vpop.f32.mrf.mxu0
    %658 = vmatprep.mubr.f32.mxu0 0.0
    %659 = vmatmul.mubr.f32.gmra.mxu0 %v529
    %v660 = vpop.f32.mrf.mxu0
    %v661 = vadd.f32 %v498, %v660
    %v662 = vpop.f32.mrf.mxu0
    %663 = vmatprep.mubr.f32.mxu0 0.0
    %664 = vmatmul.mubr.f32.gmra.mxu0 %v532
    %v665 = vpop.f32.mrf.mxu0
    %v666 = vadd.f32 %v498, %v665
    %v667 = vpop.f32.mrf.mxu0
    %668 = vmatprep.mubr.f32.mxu0 0.0
    %669 = vmatmul.mubr.f32.gmra.mxu0 %v535
    %v670 = vpop.f32.mrf.mxu0
    %v671 = vadd.f32 %v498, %v670
    %v672 = vpop.f32.mrf.mxu0
    %673 = vmatprep.mubr.f32.mxu0 0.0
    %674 = vmatmul.mubr.f32.gmra.mxu0 %v538
    %v675 = vpop.f32.mrf.mxu0
    %v676 = vadd.f32 %v498, %v675
    %v677 = vpop.f32.mrf.mxu0
    %678 = vmatprep.mubr.f32.mxu0 0.0
    %679 = vmatmul.mubr.f32.gmra.mxu0 %v541
    %v680 = vpop.f32.mrf.mxu0
    %v681 = vadd.f32 %v498, %v680
    %v682 = vpop.f32.mrf.mxu0
    %683 = vmatprep.mubr.f32.mxu0 0.0
    %684 = vmatmul.mubr.f32.gmra.mxu0 %v544
    %v685 = vpop.f32.mrf.mxu0
    %v686 = vadd.f32 %v498, %v685
    %v687 = vpop.f32.mrf.mxu0
    %688 = vmatprep.mubr.f32.mxu0 0.0
    %689 = vmatmul.mubr.f32.gmra.mxu0 %v547
    %v690 = vpop.f32.mrf.mxu0
    %v691 = vadd.f32 %v498, %v690
    %v692 = vpop.f32.mrf.mxu0
    %693 = vdwg.mxu0
    %v694 = vmax.f32 %v616, 0.0
    %v695 = vmax.f32 %v621, 0.0
    %v696 = vmax.f32 %v626, 0.0
    %v697 = vmax.f32 %v631, 0.0
    %v698 = vmax.f32 %v636, 0.0
    %v699 = vmax.f32 %v641, 0.0
    %v700 = vmax.f32 %v646, 0.0
    %v701 = vmax.f32 %v651, 0.0
    %v702 = vmax.f32 %v656, 0.0
    %v703 = vmax.f32 %v661, 0.0
    %v704 = vmax.f32 %v666, 0.0
    %v705 = vmax.f32 %v671, 0.0
    %v706 = vmax.f32 %v676, 0.0
    %v707 = vmax.f32 %v681, 0.0
    %v708 = vmax.f32 %v686, 0.0
    %v709 = vmax.f32 %v691, 0.0
    %vm710 = vcmask 523264
    %v711 = vsel %vm710, %v694, -inf
    %v712 = vsel %vm710, %v695, -inf
    %v713 = vsel %vm710, %v696, -inf
    %v714 = vmax.f32 %v711, %v713
    %v715 = vsel %vm710, %v697, -inf
    %v716 = vmax.f32 %v712, %v715
    %v717 = vsel %vm710, %v698, -inf
    %v718 = vmax.f32 %v714, %v717
    %v719 = vsel %vm710, %v699, -inf
    %v720 = vmax.f32 %v716, %v719
    %v721 = vsel %vm710, %v700, -inf
    %v722 = vmax.f32 %v718, %v721
    %v723 = vsel %vm710, %v701, -inf
    %v724 = vmax.f32 %v720, %v723
    %v725 = vmax.f32 %v722, %v724
    %v726 = vrot.slane %v725, 4
    %v727 = vmax.f32 %v725, %v726
    %v728 = vrot.slane %v727, 2
    %v729 = vmax.f32 %v727, %v728
    %v730 = vrot.slane %v729, 1
    %v731 = vmax.f32 %v729, %v730
    %v732 = vsel %vm710, %v702, -inf
    %v733 = vsel %vm710, %v703, -inf
    %v734 = vsel %vm710, %v704, -inf
    %v735 = vmax.f32 %v732, %v734
    %v736 = vsel %vm710, %v705, -inf
    %v737 = vmax.f32 %v733, %v736
    %v738 = vsel %vm710, %v706, -inf
    %v739 = vmax.f32 %v735, %v738
    %v740 = vsel %vm710, %v707, -inf
    %v741 = vmax.f32 %v737, %v740
    %v742 = vsel %vm710, %v708, -inf
    %v743 = vmax.f32 %v739, %v742
    %v744 = vsel %vm710, %v709, -inf
    %v745 = vmax.f32 %v741, %v744
    %v746 = vmax.f32 %v743, %v745
    %v747 = vrot.slane %v746, 4
    %v748 = vmax.f32 %v746, %v747
    %v749 = vrot.slane %v748, 2
    %v750 = vmax.f32 %v748, %v749
    %v751 = vrot.slane %v750, 1
    %v752 = vmax.f32 %v750, %v751
    %v753 = vld [vmem:[%s5] sm:$0xff]
    %v754 = vld [vmem:[%s5 + $0x8] sm:$0xff]
    %v755 = vld [vmem:[%s5 + $0x10] sm:$0xff]
    %v756 = vld [vmem:[%s5 + $0x18] sm:$0xff]
    %v757 = vld [vmem:[%s5 + $0x20] sm:$0xff]
    %v758 = vld [vmem:[%s5 + $0x28] sm:$0xff]
    %v759 = vld [vmem:[%s5 + $0x30] sm:$0xff]
    %v760 = vld [vmem:[%s5 + $0x38] sm:$0xff]
    %v761 = vld [vmem:[%s6] sm:$0x1]
    %v763 = vlaneseq
    %v764 = vshrl.u32 %v763, 7
    %v765 = vsub.s32 0, %v764
    %v766 = vrot.slane %v761, %v765
    %vm770 = vcmask 1041409
    %v771 = vsel %vm770, %v752, %v731
    %v772 = vsel %vm710, %v771, 0
    %774 = vmatprep.subr.mxu0 0.0
    %775 = vmatpush1.msra.mxu0 0.0
    %776 = vmatprep.subr.mxu0 0.0
    %777 = vmatpush1.msra.mxu0 0.0
    %778 = vmatprep.subr.mxu0 0.0
    %779 = vmatpush1.msra.mxu0 0.0
    %780 = vmatprep.subr.mxu0 0.0
    %781 = vmatpush1.msra.mxu0 0.0
    %782 = vmatprep.subr.mxu0 0.0
    %783 = vmatpush1.msra.mxu0 0.0
    %784 = vmatprep.subr.mxu0 0.0
    %785 = vmatpush1.msra.mxu0 0.0
    %786 = vmatprep.subr.mxu0 0.0
    %787 = vmatpush1.msra.mxu0 0.0
    %788 = vmatprep.subr.mxu0 0.0
    %789 = vmatpush1.msra.mxu0 0.0
    %790 = vmatprep.subr.mxu0 0.0
    %791 = vmatpush1.msra.mxu0 %v760
    %792 = vmatprep.subr.mxu0 0.0
    %793 = vmatpush1.msra.mxu0 %v759
    %794 = vmatprep.subr.mxu0 0.0
    %795 = vmatpush1.msra.mxu0 %v758
    %796 = vmatprep.subr.mxu0 0.0
    %797 = vmatpush1.msra.mxu0 %v757
    %798 = vmatprep.subr.mxu0 0.0
    %799 = vmatpush1.msra.mxu0 %v756
    %800 = vmatprep.subr.mxu0 0.0
    %801 = vmatpush1.msra.mxu0 %v755
    %802 = vmatprep.subr.mxu0 0.0
    %803 = vmatpush1.msra.mxu0 %v754
    %804 = vmatprep.subr.mxu0 0.0
    %805 = vmatpush1.msra.mxu0 %v753
    %806 = vmatprep.subr.mxu0 0.0
    %807 = vmatpush2.msra.mxu0 0.0
    %808 = vmatprep.subr.mxu0 0.0
    %809 = vmatpush2.msra.mxu0 0.0
    %810 = vmatprep.subr.mxu0 0.0
    %811 = vmatpush2.msra.mxu0 0.0
    %812 = vmatprep.subr.mxu0 0.0
    %813 = vmatpush2.msra.mxu0 0.0
    %814 = vmatprep.subr.mxu0 0.0
    %815 = vmatpush2.msra.mxu0 0.0
    %816 = vmatprep.subr.mxu0 0.0
    %817 = vmatpush2.msra.mxu0 0.0
    %818 = vmatprep.subr.mxu0 0.0
    %819 = vmatpush2.msra.mxu0 0.0
    %820 = vmatprep.subr.mxu0 0.0
    %821 = vmatpush2.msra.mxu0 0.0
    %822 = vmatprep.subr.mxu0 0.0
    %823 = vmatpush2.msra.mxu0 0.0
    %824 = vmatprep.subr.mxu0 0.0
    %825 = vmatpush2.msra.mxu0 0.0
    %826 = vmatprep.subr.mxu0 0.0
    %827 = vmatpush2.msra.mxu0 0.0
    %828 = vmatprep.subr.mxu0 0.0
    %829 = vmatpush2.msra.mxu0 0.0
    %830 = vmatprep.subr.mxu0 0.0
    %831 = vmatpush2.msra.mxu0 0.0
    %832 = vmatprep.subr.mxu0 0.0
    %833 = vmatpush2.msra.mxu0 0.0
    %834 = vmatprep.subr.mxu0 0.0
    %835 = vmatpush2.msra.mxu0 0.0
    %836 = vmatprep.subr.mxu0 0.0
    %837 = vmatpush2.msra.mxu0 0.0
    %838 = vmatprep.mubr.f32.mxu0 0.0
    %839 = vmatmul.mubr.f32.gmra.mxu0 %v772
    %v840 = vpop.f32.mrf.mxu0
    %v841 = vadd.f32 %v766, %v840
    %v842 = vpop.f32.mrf.mxu0
    %843 = vdwg.mxu0
    %v844 = vmax.f32 %v841, 0.0
    %v845 = vld [vmem:[%s7] sm:$0xff]
    %v846 = vld [vmem:[%s7 + $0x8] sm:$0xff]
    %v847 = vld [vmem:[%s7 + $0x10] sm:$0xff]
    %v848 = vld [vmem:[%s7 + $0x18] sm:$0xff]
    %v849 = vld [vmem:[%s8] sm:$0x1]
    %v851 = vlaneseq
    %v852 = vshrl.u32 %v851, 7
    %v853 = vsub.s32 0, %v852
    %v854 = vrot.slane %v849, %v853
    %v857 = vsel %vm500, %v844, 0
    %859 = vmatprep.subr.mxu0 0.0
    %860 = vmatpush1.msra.mxu0 0.0
    %861 = vmatprep.subr.mxu0 0.0
    %862 = vmatpush1.msra.mxu0 0.0
    %863 = vmatprep.subr.mxu0 0.0
    %864 = vmatpush1.msra.mxu0 0.0
    %865 = vmatprep.subr.mxu0 0.0
    %866 = vmatpush1.msra.mxu0 0.0
    %867 = vmatprep.subr.mxu0 0.0
    %868 = vmatpush1.msra.mxu0 0.0
    %869 = vmatprep.subr.mxu0 0.0
    %870 = vmatpush1.msra.mxu0 0.0
    %871 = vmatprep.subr.mxu0 0.0
    %872 = vmatpush1.msra.mxu0 0.0
    %873 = vmatprep.subr.mxu0 0.0
    %874 = vmatpush1.msra.mxu0 0.0
    %875 = vmatprep.subr.mxu0 0.0
    %876 = vmatpush1.msra.mxu0 0.0
    %877 = vmatprep.subr.mxu0 0.0
    %878 = vmatpush1.msra.mxu0 0.0
    %879 = vmatprep.subr.mxu0 0.0
    %880 = vmatpush1.msra.mxu0 0.0
    %881 = vmatprep.subr.mxu0 0.0
    %882 = vmatpush1.msra.mxu0 0.0
    %883 = vmatprep.subr.mxu0 0.0
    %884 = vmatpush1.msra.mxu0 %v848
    %885 = vmatprep.subr.mxu0 0.0
    %886 = vmatpush1.msra.mxu0 %v847
    %887 = vmatprep.subr.mxu0 0.0
    %888 = vmatpush1.msra.mxu0 %v846
    %889 = vmatprep.subr.mxu0 0.0
    %890 = vmatpush1.msra.mxu0 %v845
    %891 = vmatprep.subr.mxu0 0.0
    %892 = vmatpush2.msra.mxu0 0.0
    %893 = vmatprep.subr.mxu0 0.0
    %894 = vmatpush2.msra.mxu0 0.0
    %895 = vmatprep.subr.mxu0 0.0
    %896 = vmatpush2.msra.mxu0 0.0
    %897 = vmatprep.subr.mxu0 0.0
    %898 = vmatpush2.msra.mxu0 0.0
    %899 = vmatprep.subr.mxu0 0.0
    %900 = vmatpush2.msra.mxu0 0.0
    %901 = vmatprep.subr.mxu0 0.0
    %902 = vmatpush2.msra.mxu0 0.0
    %903 = vmatprep.subr.mxu0 0.0
    %904 = vmatpush2.msra.mxu0 0.0
    %905 = vmatprep.subr.mxu0 0.0
    %906 = vmatpush2.msra.mxu0 0.0
    %907 = vmatprep.subr.mxu0 0.0
    %908 = vmatpush2.msra.mxu0 0.0
    %909 = vmatprep.subr.mxu0 0.0
    %910 = vmatpush2.msra.mxu0 0.0
    %911 = vmatprep.subr.mxu0 0.0
    %912 = vmatpush2.msra.mxu0 0.0
    %913 = vmatprep.subr.mxu0 0.0
    %914 = vmatpush2.msra.mxu0 0.0
    %915 = vmatprep.subr.mxu0 0.0
    %916 = vmatpush2.msra.mxu0 0.0
    %917 = vmatprep.subr.mxu0 0.0
    %918 = vmatpush2.msra.mxu0 0.0
    %919 = vmatprep.subr.mxu0 0.0
    %920 = vmatpush2.msra.mxu0 0.0
    %921 = vmatprep.subr.mxu0 0.0
    %922 = vmatpush2.msra.mxu0 0.0
    %923 = vmatprep.mubr.f32.mxu0 0.0
    %924 = vmatmul.mubr.f32.gmra.mxu0 %v857
    %v925 = vpop.f32.mrf.mxu0
    %v926 = vadd.f32 %v854, %v925
    %v927 = vpop.f32.mrf.mxu0
    %928 = vdwg.mxu0
    %929 = vst [vmem:[#allocation2] sm:$0x3] %v926
    // Predicated region
    $region38: #{tpu_custom_call.1} parent=1 // pred_check
      _
    $region39: #{tpu_custom_call.1} parent=1 // pred_check_branch
      %931 = sbr.rel (0) target = $region41
    $region40: #{tpu_custom_call.1} parent=1 // pred_region
      %s933 = ssub.s32 32, 32
      %934 = vsyncadd [#allocation3], %s933
      %s936 = sshll.u32 [#allocation2], 4
      %s937 = int_to_ptr.vmem [resolvable:$true] %s936
      %939 = dma.vmem_to_hbm [thread:$0]  %s937, 32, %s9, [#allocation3]
    $region41: #{tpu_custom_call.1} parent=1 // pred_fallthru
      _
    // Predicated region
    $region42: #{tpu_custom_call.1} parent=1 // pred_check
      _
    $region43: #{tpu_custom_call.1} parent=1 // pred_check_branch
      %941 = sbr.rel (0) target = $region45
    $region44: #{tpu_custom_call.1} parent=1 // pred_region
      %942 = dma.done [#allocation3], 32
    $region45: #{tpu_custom_call.1} parent=1 // pred_fallthru
      _
    %943 = vsyncpa [#allocation3], 1

</llo_original>
